<compile_context>
chip_gen: v5e
topology: v5e:2x2
jax: 0.10.0
libtpu: 0.0.40
codegen_flags: <defaults>
</compile_context>

<pallas_src>
import functools

import jax
import jax.numpy as jnp
from jax.experimental import pallas as pl
from jax.experimental.pallas import tpu as pltpu


def _patch_embed_kernel(x_ref, w_ref, b_ref, g_ref, beta_ref, o_ref):
    """One (n, L-tile) block:  o = LayerNorm_E( W @ x + b ) * gamma + beta.

    x_ref:    (1, K, TL)  im2col activation slab (K-major)
    w_ref:    (E, K)      Conv3d weight reshaped
    b_ref:    (E, 1)      conv bias
    g_ref:    (E, 1)      LayerNorm gamma
    beta_ref: (E, 1)      LayerNorm beta
    o_ref:    (1, E, TL)  output, already channel-major (lane-dense stores)
    """
    x = x_ref[0]            # (K, TL) -- native dtype so bf16 operands (if any)
    w = w_ref[...]          # (E, K)     hit the native bf16 MXU path

    # Conv3d-as-matmul + bias; f32 accumulation on the MXU.
    y = jnp.dot(w, x, preferred_element_type=jnp.float32)           # (E, TL)
    y = y + b_ref[...].astype(jnp.float32)                          # lane bcast

    # LayerNorm over the embed dim (sublane axis); one-pass biased stats,
    # eps = 1e-5 -- exactly nn.LayerNorm.  All statistics in f32.
    inv_e = 1.0 / float(y.shape[0])
    mean = jnp.sum(y, axis=0, keepdims=True) * inv_e                 # (1, TL)
    var = jnp.sum(y * y, axis=0, keepdims=True) * inv_e - mean * mean
    var = jnp.maximum(var, 0.0)
    y = (y - mean) * jax.lax.rsqrt(var + 1e-5)
    y = y * g_ref[...].astype(jnp.float32) + beta_ref[...].astype(jnp.float32)

    # Review #9 (v7x, only if no longer HBM-bound): chunk TL in 128-256 lane
    # slices so y stays in vregs, and fold the E-sum into the MXU via an extra
    # precomputed weight row.  Not applied while the kernel is HBM-bound.
    o_ref[0] = y.astype(o_ref.dtype)


def _round_up(a, b):
    return ((a + b - 1) // b) * b


def _proj_norm_pallas(x3d, w2, b2, g2, be2, *, tl=4096,
                      out_dtype=jnp.float32, input_fusion=True):
    """x3d: (N, K, L), w2: (E, K), b2/g2/be2: (E, 1) -> (N, E, L)."""
    N, K, L = x3d.shape
    E = w2.shape[0]

    # Lane tile: multiple of 128 for dense vector stores (review #8: default
    # 4096, sweep 512..4096 for video-scale L).
    tl = max(128, (int(tl) // 128) * 128)
    if N < 2 and L > 128:
        # Review #4 (v7x has 2 TensorCores): when the batch axis alone cannot
        # feed both cores, cap tl so the L axis contributes several grid
        # blocks instead of a single (1, 1) grid.
        tl = min(tl, max(128, _round_up(pl.cdiv(L, 4), 128)))
    if L <= tl:
        tl = L            # full-width single tile (block == full dim is legal)
    nl = pl.cdiv(L, tl)   # ragged last tile handled by Pallas partial-block
                          # masking (safe: LayerNorm is strictly per-column)

    compiler_params = pltpu.CompilerParams(
        dimension_semantics=("parallel", "parallel"),
        # Review #1: allow XLA to fuse the im2col reshape/transpose producer
        # into the activation operand so the (N, K, L) array need not be
        # materialized in HBM.
        allow_input_fusion=(
            [True, False, False, False, False] if input_fusion else None),
    )

    return pl.pallas_call(
        _patch_embed_kernel,
        out_shape=jax.ShapeDtypeStruct((N, E, L), out_dtype),
        grid=(N, nl),
        in_specs=[
            # Review #7: add pipeline_mode=pl.Buffered(3) here if profiling
            # shows exposed input DMA (per-step compute < per-step DMA).
            pl.BlockSpec((1, K, tl), lambda n, j: (n, 0, j)),   # im2col slab
            pl.BlockSpec((E, K), lambda n, j: (0, 0)),          # projection W
            pl.BlockSpec((E, 1), lambda n, j: (0, 0)),          # conv bias
            pl.BlockSpec((E, 1), lambda n, j: (0, 0)),          # LN gamma
            pl.BlockSpec((E, 1), lambda n, j: (0, 0)),          # LN beta
        ],
        out_specs=pl.BlockSpec((1, E, tl), lambda n, j: (n, 0, j)),
        compiler_params=compiler_params,
    )(x3d, w2, b2, g2, be2)


def patch_embed_3d(x, conv_w, conv_b, ln_g, ln_b, patch_size=(2, 4, 4), *,
                   tl=4096, compute_dtype=None, out_dtype=jnp.float32,
                   input_fusion=True):
    """x: (N, C, D, H, W) f32.  conv_w: (E, C, pd, ph, pw).  -> (N, E, D', H', W').

    compute_dtype: set to jnp.bfloat16 to halve activation/weight HBM traffic
    (review #2); kept at None (f32) by default because with K=96 the bf16
    operand error exceeds the 2e-4 correctness tolerance.
    """
    pd, ph, pw = patch_size
    N, C, D, H, W = x.shape
    E = conv_w.shape[0]

    # Right/bottom zero padding to multiples of patch_size (mirrors F.pad).
    pad_d = (-D) % pd
    pad_h = (-H) % ph
    pad_w = (-W) % pw
    if pad_d or pad_h or pad_w:
        x = jnp.pad(x, ((0, 0), (0, 0), (0, pad_d), (0, pad_h), (0, pad_w)))
    Dp, Hp, Wp = (D + pad_d) // pd, (H + pad_h) // ph, (W + pad_w) // pw
    K = C * pd * ph * pw
    L = Dp * Hp * Wp

    if compute_dtype is not None:
        x = x.astype(compute_dtype)
        conv_w = conv_w.astype(compute_dtype)

    # im2col for a stride==kernel Conv3d, K-major so the kernel output is
    # already channel-major.  The first reshape is a free dim-split; the
    # transpose is the relayout that allow_input_fusion asks XLA to fold into
    # the pallas_call operand instead of materializing in HBM.
    xp = x.reshape(N, C, Dp, pd, Hp, ph, Wp, pw)
    xp = xp.transpose(0, 1, 3, 5, 7, 2, 4, 6)
    x3d = xp.reshape(N, K, L)

    # Conv3d weight (E, C, pd, ph, pw) -> (E, K) (same channel-major K order).
    w2 = conv_w.reshape(E, K)
    b2 = conv_b.reshape(E, 1).astype(jnp.float32)
    g2 = ln_g.reshape(E, 1).astype(jnp.float32)
    be2 = ln_b.reshape(E, 1).astype(jnp.float32)

    y = _proj_norm_pallas(x3d, w2, b2, g2, be2, tl=tl,
                          out_dtype=out_dtype, input_fusion=input_fusion)

    # Channel-major already; the NCDHW result is a free reshape (no transpose).
    return y.reshape(N, E, Dp, Hp, Wp)


# TODO(synk): `self.proj_lif` (MultiStepLIFNode) is constructed in __init__ but
# never called in forward(), so it is intentionally omitted here.


def _reference(x, conv_w, conv_b, ln_g, ln_b, patch_size):
    """Pure-JAX reference (same math as the PyTorch module), full f32 precision."""
    pd, ph, pw = patch_size
    _, _, D, H, W = x.shape
    x = jnp.pad(x, ((0, 0), (0, 0),
                    (0, (-D) % pd), (0, (-H) % ph), (0, (-W) % pw)))
    y = jax.lax.conv_general_dilated(
        x, conv_w, window_strides=patch_size, padding="VALID",
        dimension_numbers=("NCDHW", "OIDHW", "NCDHW"),
        precision=jax.lax.Precision.HIGHEST)
    y = y + conv_b[None, :, None, None, None]
    Nn, E, Dp, Hp, Wp = y.shape
    t = y.reshape(Nn, E, -1).transpose(0, 2, 1)
    mean = t.mean(-1, keepdims=True)
    var = ((t - mean) ** 2).mean(-1, keepdims=True)
    t = (t - mean) / jnp.sqrt(var + 1e-5) * ln_g + ln_b
    return t.transpose(0, 2, 1).reshape(Nn, E, Dp, Hp, Wp)


if __name__ == "__main__":
    patch_size = (2, 4, 4)
    in_chans = 3
    embed_dim = 96

    key = jax.random.PRNGKey(0)
    kx1, kx2, kw, kb, kg, kbe = jax.random.split(key, 6)

    fan_in = in_chans * patch_size[0] * patch_size[1] * patch_size[2]
    conv_w = jax.random.normal(
        kw, (embed_dim, in_chans, *patch_size), dtype=jnp.float32) * (1.0 / fan_in ** 0.5)
    conv_b = jax.random.normal(kb, (embed_dim,), dtype=jnp.float32) * 0.01
    ln_g = 1.0 + 0.1 * jax.random.normal(kg, (embed_dim,), dtype=jnp.float32)
    ln_b = 0.1 * jax.random.normal(kbe, (embed_dim,), dtype=jnp.float32)

    fn = jax.jit(functools.partial(patch_embed_3d, patch_size=patch_size))

    cases = [
        # Exact multiples of patch_size, batch of 2.
        jax.random.normal(kx1, (2, in_chans, 4, 16, 16), dtype=jnp.float32),
        # Non-multiple D/H/W: exercises the zero-padding path plus the N==1
        # multi-L-tile path (grid (1, 2), ragged last tile).
        jax.random.normal(kx2, (1, in_chans, 6, 31, 30), dtype=jnp.float32),
    ]

    for x in cases:
        out = fn(x, conv_w, conv_b, ln_g, ln_b)
        jax.block_until_ready(out)

        expected = _reference(x, conv_w, conv_b, ln_g, ln_b, patch_size)
        assert out.shape == expected.shape, (out.shape, expected.shape)
        max_err = float(jnp.max(jnp.abs(out - expected)))
        assert jnp.allclose(out, expected, atol=2e-4, rtol=2e-4), (x.shape, max_err)

    print("KERNEL_OK")
</pallas_src>

<mosaic_0001>
module attributes {stable_mosaic.version = 11 : i64} {
  func.func @_patch_embed_kernel(%arg0: i32, %arg1: i32, %arg2: memref<1x96x32xf32, #tpu.memory_space<vmem>>, %arg3: memref<96x96xf32, #tpu.memory_space<vmem>>, %arg4: memref<96x1xf32, #tpu.memory_space<vmem>>, %arg5: memref<96x1xf32, #tpu.memory_space<vmem>>, %arg6: memref<96x1xf32, #tpu.memory_space<vmem>>, %arg7: memref<1x96x32xf32, #tpu.memory_space<vmem>>) attributes {dimension_semantics = [#tpu.dimension_semantics<parallel>, #tpu.dimension_semantics<parallel>], iteration_bounds = array<i64: 2, 1>, scalar_prefetch = 0 : i64, scratch_operands = 0 : i64, tpu.core_type = #tpu.core_type<tc>, window_params = [{transform_indices = @transform_0, window_bounds = array<i64: 1, 96, 32>}, {pipeline_mode = #tpu.pipeline_mode<synchronous>, transform_indices = @transform_1, window_bounds = array<i64: 96, 96>}, {pipeline_mode = #tpu.pipeline_mode<synchronous>, transform_indices = @transform_2, window_bounds = array<i64: 96, 1>}, {pipeline_mode = #tpu.pipeline_mode<synchronous>, transform_indices = @transform_3, window_bounds = array<i64: 96, 1>}, {pipeline_mode = #tpu.pipeline_mode<synchronous>, transform_indices = @transform_4, window_bounds = array<i64: 96, 1>}, {transform_indices = @transform_5, window_bounds = array<i64: 1, 96, 32>}]} {
    %c0 = arith.constant 0 : index
    %c0_0 = arith.constant 0 : index
    %c0_1 = arith.constant 0 : index
    %0 = vector.load %arg2[%c0, %c0_0, %c0_1] : memref<1x96x32xf32, #tpu.memory_space<vmem>>, vector<1x96x32xf32>
    %1 = vector.shape_cast %0 : vector<1x96x32xf32> to vector<96x32xf32>
    %c0_2 = arith.constant 0 : index
    %c0_3 = arith.constant 0 : index
    %2 = vector.load %arg3[%c0_2, %c0_3] : memref<96x96xf32, #tpu.memory_space<vmem>>, vector<96x96xf32>
    %cst = arith.constant dense<0.000000e+00> : vector<96x32xf32>
    %3 = tpu.matmul %2, %1, %cst {dimension_numbers = #tpu.dot_dimension_numbers<[1], [0], [0], [1], [0, 0, 1, 1], [], []>} : vector<96x96xf32>, vector<96x32xf32>, vector<96x32xf32> -> vector<96x32xf32>
    %c0_4 = arith.constant 0 : index
    %c0_5 = arith.constant 0 : index
    %4 = vector.load %arg4[%c0_4, %c0_5] : memref<96x1xf32, #tpu.memory_space<vmem>>, vector<96x1xf32>
    %5 = vector.broadcast %4 : vector<96x1xf32> to vector<96x32xf32>
    %6 = arith.addf %3, %5 : vector<96x32xf32>
    %cst_6 = arith.constant dense<0.000000e+00> : vector<32xf32>
    %7 = vector.multi_reduction <add>, %6, %cst_6 [0] : vector<96x32xf32> to vector<32xf32>
    %8 = vector.shape_cast %7 : vector<32xf32> to vector<1x32xf32>
    %cst_7 = arith.constant 0.010416667 : f32
    %9 = vector.broadcast %cst_7 : f32 to vector<1x32xf32>
    %10 = arith.mulf %8, %9 : vector<1x32xf32>
    %11 = arith.mulf %6, %6 : vector<96x32xf32>
    %cst_8 = arith.constant dense<0.000000e+00> : vector<32xf32>
    %12 = vector.multi_reduction <add>, %11, %cst_8 [0] : vector<96x32xf32> to vector<32xf32>
    %13 = vector.shape_cast %12 : vector<32xf32> to vector<1x32xf32>
    %cst_9 = arith.constant 0.010416667 : f32
    %14 = vector.broadcast %cst_9 : f32 to vector<1x32xf32>
    %15 = arith.mulf %13, %14 : vector<1x32xf32>
    %16 = arith.mulf %10, %10 : vector<1x32xf32>
    %17 = arith.subf %15, %16 : vector<1x32xf32>
    %cst_10 = arith.constant 0.000000e+00 : f32
    %18 = vector.broadcast %cst_10 : f32 to vector<1x32xf32>
    %19 = arith.maximumf %17, %18 : vector<1x32xf32>
    %20 = vector.broadcast %10 : vector<1x32xf32> to vector<96x32xf32>
    %21 = arith.subf %6, %20 : vector<96x32xf32>
    %cst_11 = arith.constant 9.99999974E-6 : f32
    %22 = vector.broadcast %cst_11 : f32 to vector<1x32xf32>
    %23 = arith.addf %19, %22 : vector<1x32xf32>
    %24 = math.rsqrt %23 : vector<1x32xf32>
    %25 = vector.broadcast %24 : vector<1x32xf32> to vector<96x32xf32>
    %26 = arith.mulf %21, %25 : vector<96x32xf32>
    %c0_12 = arith.constant 0 : index
    %c0_13 = arith.constant 0 : index
    %27 = vector.load %arg5[%c0_12, %c0_13] : memref<96x1xf32, #tpu.memory_space<vmem>>, vector<96x1xf32>
    %28 = vector.broadcast %27 : vector<96x1xf32> to vector<96x32xf32>
    %29 = arith.mulf %26, %28 : vector<96x32xf32>
    %c0_14 = arith.constant 0 : index
    %c0_15 = arith.constant 0 : index
    %30 = vector.load %arg6[%c0_14, %c0_15] : memref<96x1xf32, #tpu.memory_space<vmem>>, vector<96x1xf32>
    %31 = vector.broadcast %30 : vector<96x1xf32> to vector<96x32xf32>
    %32 = arith.addf %29, %31 : vector<96x32xf32>
    %c0_16 = arith.constant 0 : index
    %c0_17 = arith.constant 0 : index
    %c0_18 = arith.constant 0 : index
    %33 = vector.load %arg7[%c0_16, %c0_17, %c0_18] : memref<1x96x32xf32, #tpu.memory_space<vmem>>, vector<1x96x32xf32>
    %34 = vector.shape_cast %33 : vector<1x96x32xf32> to vector<96x32xf32>
    %35 = vector.shape_cast %32 : vector<96x32xf32> to vector<1x96x32xf32>
    tpu.vector_store %arg7[%c0_16, %c0_17, %c0_18], %35 {strides = array<i32>} : memref<1x96x32xf32, #tpu.memory_space<vmem>>, vector<1x96x32xf32>,
    return
  }
  func.func @transform_0(%arg0: i32, %arg1: i32) -> (i32, i32, i32) {
    %c0_i32 = arith.constant 0 : i32
    %c0_i32_0 = arith.constant 0 : i32
    return %arg0, %c0_i32, %arg1 : i32, i32, i32
  }
  func.func @transform_1(%arg0: i32, %arg1: i32) -> (i32, i32) {
    %c0_i32 = arith.constant 0 : i32
    %c0_i32_0 = arith.constant 0 : i32
    %c0_i32_1 = arith.constant 0 : i32
    return %c0_i32, %c0_i32_0 : i32, i32
  }
  func.func @transform_2(%arg0: i32, %arg1: i32) -> (i32, i32) {
    %c0_i32 = arith.constant 0 : i32
    %c0_i32_0 = arith.constant 0 : i32
    %c0_i32_1 = arith.constant 0 : i32
    return %c0_i32, %c0_i32_0 : i32, i32
  }
  func.func @transform_3(%arg0: i32, %arg1: i32) -> (i32, i32) {
    %c0_i32 = arith.constant 0 : i32
    %c0_i32_0 = arith.constant 0 : i32
    %c0_i32_1 = arith.constant 0 : i32
    return %c0_i32, %c0_i32_0 : i32, i32
  }
  func.func @transform_4(%arg0: i32, %arg1: i32) -> (i32, i32) {
    %c0_i32 = arith.constant 0 : i32
    %c0_i32_0 = arith.constant 0 : i32
    %c0_i32_1 = arith.constant 0 : i32
    return %c0_i32, %c0_i32_0 : i32, i32
  }
  func.func @transform_5(%arg0: i32, %arg1: i32) -> (i32, i32, i32) {
    %c0_i32 = arith.constant 0 : i32
    %c0_i32_0 = arith.constant 0 : i32
    return %arg0, %c0_i32, %arg1 : i32, i32, i32
  }
}

</mosaic_0001>

<llo_original>
// kernel: patch_embed_3d.1
$region0: #{patch_embed_3d.1}
  #allocation0 [shape = 'u32[]', space=smem, size = 0x4, offset = 0x4, fixed_abs, tag = 'smem constant byte address 0x4 - core index']
  #allocation1 [shape = 'u32[72,128]{1,0:T(1,128)}', space=vmem, size = 0x9000, scoped, tag = 'internal scratch']
  %s0 = inlined_call_operand.vmem [shape: f32[2,96,32], index: 0, kind: input, shape index: {}]
  %s1 = inlined_call_operand.vmem [shape: f32[96,96], index: 1, kind: input, shape index: {}]
  %s2 = inlined_call_operand.vmem [shape: f32[96,1], index: 2, kind: input, shape index: {}]
  %s3 = inlined_call_operand.vmem [shape: f32[96,1], index: 3, kind: input, shape index: {}]
  %s4 = inlined_call_operand.vmem [shape: f32[96,1], index: 4, kind: input, shape index: {}]
  %s5 = inlined_call_operand.vmem [shape: f32[2,96,32], index: 5, kind: output, shape index: {}]
  %s6 = sld [smem:[#allocation0]]
  $region53: #{patch_embed_3d.1} parent=0
    _
  %s8 = ssub.s32 1, %s6
  %s9 = scalar_select 0, %s8, %s6
  loop: start=0, step=1, limit=4
  $region2: #{patch_embed_3d.1} parent=0 // loop_pre_header
    _
  $region3: #{patch_embed_3d.1} parent=0 // loop_header
    %s11 = sphi 0, %s15
    %p12 = scmp.ge.s32.totalorder %s11, 4
    %s18 = sphi 0, %s30
    %s19 = sphi 0, %s26
    %s20 = sphi 0, %s18
    %s21 = sphi 0, %s19
    %s22 = sphi 0, %s20
    %s23 = sphi 0, %s21
    %s35 = sphi 0, %s37
    %s38 = sphi 0, %s35
    %s39 = sphi 0, %s38
    %s55 = sphi 0, %s39
    %s59 = sphi 0, %s59
    %s61 = sphi 0, %s59
    %s62 = sphi 0, %s61
    %s76 = sphi 0, %s62
    %s80 = sphi 0, %s80
    %s82 = sphi 0, %s80
    %s83 = sphi 0, %s82
    %s97 = sphi 0, %s83
    %s101 = sphi 0, %s101
    %s103 = sphi 0, %s101
    %s104 = sphi 0, %s103
    %s118 = sphi 0, %s104
    %s122 = sphi 0, %s122
    %s124 = sphi 0, %s122
    %s125 = sphi 0, %s124
    %s139 = sphi 0, %s125
    %s147 = sphi 0, %s149
    %s150 = sphi 0, %s147
    %s151 = sphi 0, %s150
    %s167 = sphi 0, %s151
  $region4: #{patch_embed_3d.1} parent=0 // loop_header_branch
    %14 = sbr.rel (%p12) target = $region8
  $region5: #{patch_embed_3d.1} parent=0 // loop_body
    %s16 = ssub.s32 %s11, 1
    %s17 = ssub.s32 %s11, 2
    %s24 = sadd.s32 1, %s19
    %p25 = scmp.ge.s32.totalorder %s24, 1
    %s26 = scalar_select %p25, 0, %s24
    %s27 = sadd.s32 1, %s18
    %s28 = scalar_select %p25, %s27, %s18
    %p29 = scmp.ge.s32.totalorder %s28, 2
    %s30 = scalar_select %p29, 0, %s28
    %s31 = ssub.s32 %s18, %s30
    %s32 = ssub.s32 %s19, %s26
    %s33 = sor.u32 %s31, %s32
    %p34 = scmp.eq.s32.totalorder %s33, 0
    %s36 = sadd.s32 %s35, 1
    %s37 = scalar_select %p34, %s35, %s36
    %p40 = pneg %p34
    %p41 = scmp.eq.s32.totalorder %s11, 1
    %p42 = por %p40, %p41
    %p43 = scmp.ne.s32.totalorder %s35, %s38
    %p44 = scmp.eq.s32.totalorder %s11, 0
    %p45 = por %p43, %p44
    %p46 = scmp.ne.s32.totalorder %s35, %s38
    %p47 = scmp.eq.s32.totalorder %s16, 1
    %p48 = por %p46, %p47
    %p49 = scmp.ne.s32.totalorder %s38, %s39
    %p50 = scmp.eq.s32.totalorder %s16, 0
    %p51 = por %p49, %p50
    %p52 = scmp.ne.s32.totalorder %s38, %s39
    %p53 = scmp.eq.s32.totalorder %s17, 1
    %p54 = por %p52, %p53
    %p56 = scmp.ne.s32.totalorder %s39, %s55
    %p57 = scmp.eq.s32.totalorder %s17, 0
    %p58 = por %p56, %p57
    %s60 = sadd.s32 %s59, 1
    %p63 = scmp.eq.s32.totalorder %s11, 1
    %p64 = scmp.ne.s32.totalorder %s59, %s61
    %p65 = scmp.eq.s32.totalorder %s11, 0
    %p66 = por %p64, %p65
    %p67 = scmp.ne.s32.totalorder %s59, %s61
    %p68 = scmp.eq.s32.totalorder %s16, 1
    %p69 = por %p67, %p68
    %p70 = scmp.ne.s32.totalorder %s61, %s62
    %p71 = scmp.eq.s32.totalorder %s16, 0
    %p72 = por %p70, %p71
    %p73 = scmp.ne.s32.totalorder %s61, %s62
    %p74 = scmp.eq.s32.totalorder %s17, 1
    %p75 = por %p73, %p74
    %p77 = scmp.ne.s32.totalorder %s62, %s76
    %p78 = scmp.eq.s32.totalorder %s17, 0
    %p79 = por %p77, %p78
    %s81 = sadd.s32 %s80, 1
    %p84 = scmp.eq.s32.totalorder %s11, 1
    %p85 = scmp.ne.s32.totalorder %s80, %s82
    %p86 = scmp.eq.s32.totalorder %s11, 0
    %p87 = por %p85, %p86
    %p88 = scmp.ne.s32.totalorder %s80, %s82
    %p89 = scmp.eq.s32.totalorder %s16, 1
    %p90 = por %p88, %p89
    %p91 = scmp.ne.s32.totalorder %s82, %s83
    %p92 = scmp.eq.s32.totalorder %s16, 0
    %p93 = por %p91, %p92
    %p94 = scmp.ne.s32.totalorder %s82, %s83
    %p95 = scmp.eq.s32.totalorder %s17, 1
    %p96 = por %p94, %p95
    %p98 = scmp.ne.s32.totalorder %s83, %s97
    %p99 = scmp.eq.s32.totalorder %s17, 0
    %p100 = por %p98, %p99
    %s102 = sadd.s32 %s101, 1
    %p105 = scmp.eq.s32.totalorder %s11, 1
    %p106 = scmp.ne.s32.totalorder %s101, %s103
    %p107 = scmp.eq.s32.totalorder %s11, 0
    %p108 = por %p106, %p107
    %p109 = scmp.ne.s32.totalorder %s101, %s103
    %p110 = scmp.eq.s32.totalorder %s16, 1
    %p111 = por %p109, %p110
    %p112 = scmp.ne.s32.totalorder %s103, %s104
    %p113 = scmp.eq.s32.totalorder %s16, 0
    %p114 = por %p112, %p113
    %p115 = scmp.ne.s32.totalorder %s103, %s104
    %p116 = scmp.eq.s32.totalorder %s17, 1
    %p117 = por %p115, %p116
    %p119 = scmp.ne.s32.totalorder %s104, %s118
    %p120 = scmp.eq.s32.totalorder %s17, 0
    %p121 = por %p119, %p120
    %s123 = sadd.s32 %s122, 1
    %p126 = scmp.eq.s32.totalorder %s11, 1
    %p127 = scmp.ne.s32.totalorder %s122, %s124
    %p128 = scmp.eq.s32.totalorder %s11, 0
    %p129 = por %p127, %p128
    %p130 = scmp.ne.s32.totalorder %s122, %s124
    %p131 = scmp.eq.s32.totalorder %s16, 1
    %p132 = por %p130, %p131
    %p133 = scmp.ne.s32.totalorder %s124, %s125
    %p134 = scmp.eq.s32.totalorder %s16, 0
    %p135 = por %p133, %p134
    %p136 = scmp.ne.s32.totalorder %s124, %s125
    %p137 = scmp.eq.s32.totalorder %s17, 1
    %p138 = por %p136, %p137
    %p140 = scmp.ne.s32.totalorder %s125, %s139
    %p141 = scmp.eq.s32.totalorder %s17, 0
    %p142 = por %p140, %p141
    %s143 = ssub.s32 %s18, %s30
    %s144 = ssub.s32 %s19, %s26
    %s145 = sor.u32 %s143, %s144
    %p146 = scmp.eq.s32.totalorder %s145, 0
    %s148 = sadd.s32 %s147, 1
    %s149 = scalar_select %p146, %s147, %s148
    %p152 = pneg %p146
    %p153 = scmp.eq.s32.totalorder %s11, 1
    %p154 = por %p152, %p153
    %p155 = scmp.ne.s32.totalorder %s147, %s150
    %p156 = scmp.eq.s32.totalorder %s11, 0
    %p157 = por %p155, %p156
    %p158 = scmp.ne.s32.totalorder %s147, %s150
    %p159 = scmp.eq.s32.totalorder %s16, 1
    %p160 = por %p158, %p159
    %p161 = scmp.ne.s32.totalorder %s150, %s151
    %p162 = scmp.eq.s32.totalorder %s16, 0
    %p163 = por %p161, %p162
    %p164 = scmp.ne.s32.totalorder %s150, %s151
    %p165 = scmp.eq.s32.totalorder %s17, 1
    %p166 = por %p164, %p165
    %p168 = scmp.ne.s32.totalorder %s151, %s167
    %p169 = scmp.eq.s32.totalorder %s17, 0
    %p170 = por %p168, %p169
    %p171 = scmp.le.s32.totalorder 1, %s11
    %p172 = scmp.lt.s32.totalorder %s11, 3
    %p173 = pnand %p171, %p172
    %p174 = pneg %p173
    // Predicated region
    $region9: #{patch_embed_3d.1} parent=5 // pred_check
      _
    $region10: #{patch_embed_3d.1} parent=5 // pred_check_branch
      %176 = sbr.rel (%p173) target = $region12
    $region11: #{patch_embed_3d.1} parent=5 // pred_region
      %s177 = ssub.s32 %s11, 1
      // Predicated region
      $region13: #{patch_embed_3d.1} parent=11 // pred_check
        %p178 = pneg %p72
      $region14: #{patch_embed_3d.1} parent=11 // pred_check_branch
        %180 = sbr.rel (%p178) target = $region16
      $region15: #{patch_embed_3d.1} parent=11 // pred_region
        _
      $region16: #{patch_embed_3d.1} parent=11 // pred_fallthru
        _
      // Predicated region
      $region17: #{patch_embed_3d.1} parent=11 // pred_check
        %p181 = pneg %p93
      $region18: #{patch_embed_3d.1} parent=11 // pred_check_branch
        %183 = sbr.rel (%p181) target = $region20
      $region19: #{patch_embed_3d.1} parent=11 // pred_region
        _
      $region20: #{patch_embed_3d.1} parent=11 // pred_fallthru
        _
      // Predicated region
      $region21: #{patch_embed_3d.1} parent=11 // pred_check
        %p184 = pneg %p114
      $region22: #{patch_embed_3d.1} parent=11 // pred_check_branch
        %186 = sbr.rel (%p184) target = $region24
      $region23: #{patch_embed_3d.1} parent=11 // pred_region
        _
      $region24: #{patch_embed_3d.1} parent=11 // pred_fallthru
        _
      // Predicated region
      $region25: #{patch_embed_3d.1} parent=11 // pred_check
        %p187 = pneg %p135
      $region26: #{patch_embed_3d.1} parent=11 // pred_check_branch
        %189 = sbr.rel (%p187) target = $region28
      $region27: #{patch_embed_3d.1} parent=11 // pred_region
        _
      $region28: #{patch_embed_3d.1} parent=11 // pred_fallthru
        _
    $region12: #{patch_embed_3d.1} parent=5 // pred_fallthru
      _
    %p190 = scmp.lt.s32.totalorder %s11, 2
    // Predicated region
    $region29: #{patch_embed_3d.1} parent=5 // pred_check
      %p191 = pneg %p190
    $region30: #{patch_embed_3d.1} parent=5 // pred_check_branch
      %193 = sbr.rel (%p191) target = $region32
    $region31: #{patch_embed_3d.1} parent=5 // pred_region
      // Predicated region
      $region33: #{patch_embed_3d.1} parent=31 // pred_check
        %p194 = pneg %p45
      $region34: #{patch_embed_3d.1} parent=31 // pred_check_branch
        %196 = sbr.rel (%p194) target = $region36
      $region35: #{patch_embed_3d.1} parent=31 // pred_region
        %p197 = scmp.lt.s32.totalorder %s18, 1
        %s198 = scalar_select %p197, %s18, 1
        %p199 = scmp.lt.s32.totalorder %s19, 0
        %s200 = scalar_select %p199, %s19, 0
        %s201 = smul.addr %s198, 12
        %s202 = sadd.s32 %s200, %s201
        %s203 = smul.addr %s202, 8
        %s204 = scalar_lea.vmem %s0, %s203
      $region36: #{patch_embed_3d.1} parent=31 // pred_fallthru
        _
    $region32: #{patch_embed_3d.1} parent=5 // pred_fallthru
      _
    %p205 = scmp.le.s32.totalorder 1, %s11
    %p206 = scmp.lt.s32.totalorder %s11, 3
    %p207 = pnand %p205, %p206
    %p208 = pneg %p207
    // Predicated region
    $region37: #{patch_embed_3d.1} parent=5 // pred_check
      _
    $region38: #{patch_embed_3d.1} parent=5 // pred_check_branch
      %210 = sbr.rel (%p207) target = $region40
    $region39: #{patch_embed_3d.1} parent=5 // pred_region
      %s211 = ssub.s32 %s11, 1
      %p212 = scmp.lt.s32.totalorder %s20, 1
      %s213 = scalar_select %p212, %s20, 1
      %p214 = scmp.lt.s32.totalorder %s21, 0
      %s215 = scalar_select %p214, %s21, 0
      %s216 = smul.addr %s213, 12
      %s217 = sadd.s32 %s215, %s216
      %s218 = smul.addr %s217, 8
      %s219 = scalar_lea.vmem %s0, %s218
      %p220 = pneg %p51
      %p221 = pneg %p48
      %p222 = pneg %p72
      %p223 = pneg %p69
      %p224 = pneg %p93
      %p225 = pneg %p90
      %p226 = pneg %p114
      %p227 = pneg %p111
      %p228 = pneg %p135
      %p229 = pneg %p132
      %p230 = pneg %p163
      %p231 = pneg %p160
      %p232 = scmp.lt.s32.totalorder %s20, 1
      %s233 = scalar_select %p232, %s20, 1
      %p234 = scmp.lt.s32.totalorder %s21, 0
      %s235 = scalar_select %p234, %s21, 0
      %s236 = smul.addr %s233, 12
      %s237 = sadd.s32 %s235, %s236
      %s238 = smul.addr %s237, 8
      %s239 = scalar_lea.vmem %s5, %s238
      %p240 = scmp.lt.s32.totalorder %s20, 1
      %s241 = scalar_select %p240, %s20, 1
      %p242 = scmp.lt.s32.totalorder %s21, 0
      %s243 = scalar_select %p242, %s21, 0
      %s244 = smul.addr %s241, 12
      %s245 = sadd.s32 %s243, %s244
      %s246 = smul.addr %s245, 8
      %s247 = scalar_lea.vmem %s0, %s246
      %p248 = scmp.lt.s32.totalorder %s20, 1
      %s249 = scalar_select %p248, %s20, 1
      %p250 = scmp.lt.s32.totalorder %s21, 0
      %s251 = scalar_select %p250, %s21, 0
      %s252 = smul.addr %s249, 12
      %s253 = sadd.s32 %s251, %s252
      %s254 = smul.addr %s253, 8
      %s255 = scalar_lea.vmem %s5, %s254
      %v256 = vld [vmem:[%s247] sm:$0xff]
      %v257 = vld [vmem:[%s247 + $0x8] sm:$0xff]
      %v258 = vld [vmem:[%s247 + $0x10] sm:$0xff]
      %v259 = vld [vmem:[%s247 + $0x18] sm:$0xff]
      %v260 = vld [vmem:[%s247 + $0x20] sm:$0xff]
      %v261 = vld [vmem:[%s247 + $0x28] sm:$0xff]
      %v262 = vld [vmem:[%s247 + $0x30] sm:$0xff]
      %v263 = vld [vmem:[%s247 + $0x38] sm:$0xff]
      %v264 = vld [vmem:[%s247 + $0x40] sm:$0xff]
      %v265 = vld [vmem:[%s247 + $0x48] sm:$0xff]
      %v266 = vld [vmem:[%s247 + $0x50] sm:$0xff]
      %v267 = vld [vmem:[%s247 + $0x58] sm:$0xff]
      %v268 = vld [vmem:[%s1] sm:$0xff]
      %v269 = vld [vmem:[%s1 + $0x8] sm:$0xff]
      %v270 = vld [vmem:[%s1 + $0x10] sm:$0xff]
      %v271 = vld [vmem:[%s1 + $0x18] sm:$0xff]
      %v272 = vld [vmem:[%s1 + $0x20] sm:$0xff]
      %v273 = vld [vmem:[%s1 + $0x28] sm:$0xff]
      %v274 = vld [vmem:[%s1 + $0x30] sm:$0xff]
      %v275 = vld [vmem:[%s1 + $0x38] sm:$0xff]
      %v276 = vld [vmem:[%s1 + $0x40] sm:$0xff]
      %v277 = vld [vmem:[%s1 + $0x48] sm:$0xff]
      %v278 = vld [vmem:[%s1 + $0x50] sm:$0xff]
      %v279 = vld [vmem:[%s1 + $0x58] sm:$0xff]
      %v280 = vld [vmem:[%s2] sm:$0xff]
      %v281 = vld [vmem:[%s2 + $0x8] sm:$0xff]
      %v282 = vld [vmem:[%s2 + $0x10] sm:$0xff]
      %v283 = vld [vmem:[%s2 + $0x18] sm:$0xff]
      %v284 = vld [vmem:[%s2 + $0x20] sm:$0xff]
      %v285 = vld [vmem:[%s2 + $0x28] sm:$0xff]
      %v286 = vld [vmem:[%s2 + $0x30] sm:$0xff]
      %v287 = vld [vmem:[%s2 + $0x38] sm:$0xff]
      %v288 = vld [vmem:[%s2 + $0x40] sm:$0xff]
      %v289 = vld [vmem:[%s2 + $0x48] sm:$0xff]
      %v290 = vld [vmem:[%s2 + $0x50] sm:$0xff]
      %v291 = vld [vmem:[%s2 + $0x58] sm:$0xff]
      %293 = vset.pattern.permute.xlu0 0
      %294 = vperm.xlu0 %293, %v280
      %v295 = vpop.permute.xlu0 %294
      %298 = vset.pattern.permute.xlu0 0
      %299 = vperm.xlu0 %298, %v281
      %v300 = vpop.permute.xlu0 %299
      %303 = vset.pattern.permute.xlu0 0
      %304 = vperm.xlu0 %303, %v282
      %v305 = vpop.permute.xlu0 %304
      %308 = vset.pattern.permute.xlu0 0
      %309 = vperm.xlu0 %308, %v283
      %v310 = vpop.permute.xlu0 %309
      %313 = vset.pattern.permute.xlu0 0
      %314 = vperm.xlu0 %313, %v284
      %v315 = vpop.permute.xlu0 %314
      %318 = vset.pattern.permute.xlu0 0
      %319 = vperm.xlu0 %318, %v285
      %v320 = vpop.permute.xlu0 %319
      %323 = vset.pattern.permute.xlu0 0
      %324 = vperm.xlu0 %323, %v286
      %v325 = vpop.permute.xlu0 %324
      %328 = vset.pattern.permute.xlu0 0
      %329 = vperm.xlu0 %328, %v287
      %v330 = vpop.permute.xlu0 %329
      %333 = vset.pattern.permute.xlu0 0
      %334 = vperm.xlu0 %333, %v288
      %v335 = vpop.permute.xlu0 %334
      %338 = vset.pattern.permute.xlu0 0
      %339 = vperm.xlu0 %338, %v289
      %v340 = vpop.permute.xlu0 %339
      %343 = vset.pattern.permute.xlu0 0
      %344 = vperm.xlu0 %343, %v290
      %v345 = vpop.permute.xlu0 %344
      %348 = vset.pattern.permute.xlu0 0
      %349 = vperm.xlu0 %348, %v291
      %v350 = vpop.permute.xlu0 %349
      %vm352 = vcmask 785408
      %v354 = vsel %vm352, %v268, 0
      %v357 = vsel %vm352, %v269, 0
      %v360 = vsel %vm352, %v270, 0
      %v363 = vsel %vm352, %v271, 0
      %v366 = vsel %vm352, %v272, 0
      %v369 = vsel %vm352, %v273, 0
      %v372 = vsel %vm352, %v274, 0
      %v375 = vsel %vm352, %v275, 0
      %v378 = vsel %vm352, %v276, 0
      %v381 = vsel %vm352, %v277, 0
      %v384 = vsel %vm352, %v278, 0
      %v387 = vsel %vm352, %v279, 0
      %389 = vmatpush.msra.mxu0 0.0
      %390 = vmatpush.msra.mxu0 0.0
      %391 = vmatpush.msra.mxu0 0.0
      %392 = vmatpush.msra.mxu0 0.0
      %393 = vmatpush.msra.mxu0 %v267
      %394 = vmatpush.msra.mxu0 %v266
      %395 = vmatpush.msra.mxu0 %v265
      %396 = vmatpush.msra.mxu0 %v264
      %397 = vmatpush.msra.mxu0 %v263
      %398 = vmatpush.msra.mxu0 %v262
      %399 = vmatpush.msra.mxu0 %v261
      %400 = vmatpush.msra.mxu0 %v260
      %401 = vmatpush.msra.mxu0 %v259
      %402 = vmatpush.msra.mxu0 %v258
      %403 = vmatpush.msra.mxu0 %v257
      %404 = vmatpush.msra.mxu0 %v256
      %405 = vmatmul.f32.gmra.mxu0 %v354
      %v406 = vpop.f32.mrf.mxu0
      %v407 = vadd.f32 %v295, %v406
      %408 = vmatmul.f32.gmra.mxu0 %v357
      %v409 = vpop.f32.mrf.mxu0
      %v410 = vadd.f32 %v300, %v409
      %411 = vmatmul.f32.gmra.mxu0 %v360
      %v412 = vpop.f32.mrf.mxu0
      %v413 = vadd.f32 %v305, %v412
      %414 = vmatmul.f32.gmra.mxu0 %v363
      %v415 = vpop.f32.mrf.mxu0
      %v416 = vadd.f32 %v310, %v415
      %417 = vmatmul.f32.gmra.mxu0 %v366
      %v418 = vpop.f32.mrf.mxu0
      %v419 = vadd.f32 %v315, %v418
      %420 = vmatmul.f32.gmra.mxu0 %v369
      %v421 = vpop.f32.mrf.mxu0
      %v422 = vadd.f32 %v320, %v421
      %423 = vmatmul.f32.gmra.mxu0 %v372
      %v424 = vpop.f32.mrf.mxu0
      %v425 = vadd.f32 %v325, %v424
      %426 = vmatmul.f32.gmra.mxu0 %v375
      %v427 = vpop.f32.mrf.mxu0
      %v428 = vadd.f32 %v330, %v427
      %429 = vmatmul.f32.gmra.mxu0 %v378
      %v430 = vpop.f32.mrf.mxu0
      %v431 = vadd.f32 %v335, %v430
      %432 = vmatmul.f32.gmra.mxu0 %v381
      %v433 = vpop.f32.mrf.mxu0
      %v434 = vadd.f32 %v340, %v433
      %435 = vmatmul.f32.gmra.mxu0 %v384
      %v436 = vpop.f32.mrf.mxu0
      %v437 = vadd.f32 %v345, %v436
      %438 = vmatmul.f32.gmra.mxu0 %v387
      %v439 = vpop.f32.mrf.mxu0
      %v440 = vadd.f32 %v350, %v439
      %441 = vdwg.mxu0
      %vm442 = vcmask 261120
      %v443 = vsel %vm442, %v407, 0.0
      %v444 = vsel %vm442, %v410, 0.0
      %v445 = vadd.f32 %v443, %v444
      %v446 = vsel %vm442, %v413, 0.0
      %v447 = vadd.f32 %v445, %v446
      %v448 = vsel %vm442, %v416, 0.0
      %v449 = vadd.f32 %v447, %v448
      %v450 = vsel %vm442, %v419, 0.0
      %v451 = vadd.f32 %v449, %v450
      %v452 = vsel %vm442, %v422, 0.0
      %v453 = vadd.f32 %v451, %v452
      %v454 = vsel %vm442, %v425, 0.0
      %v455 = vadd.f32 %v453, %v454
      %v456 = vsel %vm442, %v428, 0.0
      %v457 = vadd.f32 %v455, %v456
      %v458 = vsel %vm442, %v431, 0.0
      %v459 = vadd.f32 %v457, %v458
      %v460 = vsel %vm442, %v434, 0.0
      %v461 = vadd.f32 %v459, %v460
      %v462 = vsel %vm442, %v437, 0.0
      %v463 = vadd.f32 %v461, %v462
      %v464 = vsel %vm442, %v440, 0.0
      %v465 = vadd.f32 %v463, %v464
      %v466 = vrot.slane %v465, 4
      %v467 = vadd.f32 %v465, %v466
      %v468 = vrot.slane %v467, 2
      %v469 = vadd.f32 %v467, %v468
      %v470 = vrot.slane %v469, 1
      %v471 = vadd.f32 %v469, %v470
      %v472 = vmul.f32 %v471, 0.010416667
      %v473 = vmul.f32 %v407, %v407
      %v474 = vmul.f32 %v410, %v410
      %v475 = vmul.f32 %v413, %v413
      %v476 = vmul.f32 %v416, %v416
      %v477 = vmul.f32 %v419, %v419
      %v478 = vmul.f32 %v422, %v422
      %v479 = vmul.f32 %v425, %v425
      %v480 = vmul.f32 %v428, %v428
      %v481 = vmul.f32 %v431, %v431
      %v482 = vmul.f32 %v434, %v434
      %v483 = vmul.f32 %v437, %v437
      %v484 = vmul.f32 %v440, %v440
      %v485 = vsel %vm442, %v473, 0.0
      %v486 = vsel %vm442, %v474, 0.0
      %v487 = vadd.f32 %v485, %v486
      %v488 = vsel %vm442, %v475, 0.0
      %v489 = vadd.f32 %v487, %v488
      %v490 = vsel %vm442, %v476, 0.0
      %v491 = vadd.f32 %v489, %v490
      %v492 = vsel %vm442, %v477, 0.0
      %v493 = vadd.f32 %v491, %v492
      %v494 = vsel %vm442, %v478, 0.0
      %v495 = vadd.f32 %v493, %v494
      %v496 = vsel %vm442, %v479, 0.0
      %v497 = vadd.f32 %v495, %v496
      %v498 = vsel %vm442, %v480, 0.0
      %v499 = vadd.f32 %v497, %v498
      %v500 = vsel %vm442, %v481, 0.0
      %v501 = vadd.f32 %v499, %v500
      %v502 = vsel %vm442, %v482, 0.0
      %v503 = vadd.f32 %v501, %v502
      %v504 = vsel %vm442, %v483, 0.0
      %v505 = vadd.f32 %v503, %v504
      %v506 = vsel %vm442, %v484, 0.0
      %v507 = vadd.f32 %v505, %v506
      %v508 = vrot.slane %v507, 4
      %v509 = vadd.f32 %v507, %v508
      %v510 = vrot.slane %v509, 2
      %v511 = vadd.f32 %v509, %v510
      %v512 = vrot.slane %v511, 1
      %v513 = vadd.f32 %v511, %v512
      %v514 = vmul.f32 %v513, 0.010416667
      %v515 = vmul.f32 %v472, %v472
      %v516 = vsub.f32 %v514, %v515
      %v517 = vmax.f32 %v516, 0.0
      %v518 = vsub.f32 %v407, %v472
      %v519 = vsub.f32 %v410, %v472
      %v520 = vsub.f32 %v413, %v472
      %v521 = vsub.f32 %v416, %v472
      %v522 = vsub.f32 %v419, %v472
      %v523 = vsub.f32 %v422, %v472
      %v524 = vsub.f32 %v425, %v472
      %v525 = vsub.f32 %v428, %v472
      %v526 = vsub.f32 %v431, %v472
      %v527 = vsub.f32 %v434, %v472
      %v528 = vsub.f32 %v437, %v472
      %v529 = vsub.f32 %v440, %v472
      %v530 = vadd.f32 %v517, 1e-05
      %v531 = vrsqrt.pop %v530
      %v532 = vmul.f32 %v531, %v530
      %v533 = vmul.f32 %v532, %v531
      %v534 = vmul.f32 0.5, %v533
      %v535 = vsub.f32 1.5, %v534
      %v536 = vmul.f32 %v531, %v535
      %vm537 = vweird.f32 %v530
      %vm538 = vweird.f32 %v531
      %vm539 = vmor %vm537, %vm538
      %v540 = vsel %vm539, %v531, %v536
      %v541 = vmul.f32 %v518, %v540
      %v542 = vmul.f32 %v519, %v540
      %v543 = vmul.f32 %v520, %v540
      %v544 = vmul.f32 %v521, %v540
      %v545 = vmul.f32 %v522, %v540
      %v546 = vmul.f32 %v523, %v540
      %v547 = vmul.f32 %v524, %v540
      %v548 = vmul.f32 %v525, %v540
      %v549 = vmul.f32 %v526, %v540
      %v550 = vmul.f32 %v527, %v540
      %v551 = vmul.f32 %v528, %v540
      %v552 = vmul.f32 %v529, %v540
      %v553 = vld [vmem:[%s3] sm:$0xff]
      %v554 = vld [vmem:[%s3 + $0x8] sm:$0xff]
      %v555 = vld [vmem:[%s3 + $0x10] sm:$0xff]
      %v556 = vld [vmem:[%s3 + $0x18] sm:$0xff]
      %v557 = vld [vmem:[%s3 + $0x20] sm:$0xff]
      %v558 = vld [vmem:[%s3 + $0x28] sm:$0xff]
      %v559 = vld [vmem:[%s3 + $0x30] sm:$0xff]
      %v560 = vld [vmem:[%s3 + $0x38] sm:$0xff]
      %v561 = vld [vmem:[%s3 + $0x40] sm:$0xff]
      %v562 = vld [vmem:[%s3 + $0x48] sm:$0xff]
      %v563 = vld [vmem:[%s3 + $0x50] sm:$0xff]
      %v564 = vld [vmem:[%s3 + $0x58] sm:$0xff]
      %566 = vset.pattern.permute.xlu0 0
      %567 = vperm.xlu0 %566, %v553
      %v568 = vpop.permute.xlu0 %567
      %571 = vset.pattern.permute.xlu0 0
      %572 = vperm.xlu0 %571, %v554
      %v573 = vpop.permute.xlu0 %572
      %576 = vset.pattern.permute.xlu0 0
      %577 = vperm.xlu0 %576, %v555
      %v578 = vpop.permute.xlu0 %577
      %581 = vset.pattern.permute.xlu0 0
      %582 = vperm.xlu0 %581, %v556
      %v583 = vpop.permute.xlu0 %582
      %586 = vset.pattern.permute.xlu0 0
      %587 = vperm.xlu0 %586, %v557
      %v588 = vpop.permute.xlu0 %587
      %591 = vset.pattern.permute.xlu0 0
      %592 = vperm.xlu0 %591, %v558
      %v593 = vpop.permute.xlu0 %592
      %596 = vset.pattern.permute.xlu0 0
      %597 = vperm.xlu0 %596, %v559
      %v598 = vpop.permute.xlu0 %597
      %601 = vset.pattern.permute.xlu0 0
      %602 = vperm.xlu0 %601, %v560
      %v603 = vpop.permute.xlu0 %602
      %606 = vset.pattern.permute.xlu0 0
      %607 = vperm.xlu0 %606, %v561
      %v608 = vpop.permute.xlu0 %607
      %611 = vset.pattern.permute.xlu0 0
      %612 = vperm.xlu0 %611, %v562
      %v613 = vpop.permute.xlu0 %612
      %616 = vset.pattern.permute.xlu0 0
      %617 = vperm.xlu0 %616, %v563
      %v618 = vpop.permute.xlu0 %617
      %621 = vset.pattern.permute.xlu0 0
      %622 = vperm.xlu0 %621, %v564
      %v623 = vpop.permute.xlu0 %622
      %v625 = vmul.f32 %v541, %v568
      %v626 = vmul.f32 %v542, %v573
      %v627 = vmul.f32 %v543, %v578
      %v628 = vmul.f32 %v544, %v583
      %v629 = vmul.f32 %v545, %v588
      %v630 = vmul.f32 %v546, %v593
      %v631 = vmul.f32 %v547, %v598
      %v632 = vmul.f32 %v548, %v603
      %v633 = vmul.f32 %v549, %v608
      %v634 = vmul.f32 %v550, %v613
      %v635 = vmul.f32 %v551, %v618
      %v636 = vmul.f32 %v552, %v623
      %v637 = vld [vmem:[%s4] sm:$0xff]
      %v638 = vld [vmem:[%s4 + $0x8] sm:$0xff]
      %v639 = vld [vmem:[%s4 + $0x10] sm:$0xff]
      %v640 = vld [vmem:[%s4 + $0x18] sm:$0xff]
      %v641 = vld [vmem:[%s4 + $0x20] sm:$0xff]
      %v642 = vld [vmem:[%s4 + $0x28] sm:$0xff]
      %v643 = vld [vmem:[%s4 + $0x30] sm:$0xff]
      %v644 = vld [vmem:[%s4 + $0x38] sm:$0xff]
      %v645 = vld [vmem:[%s4 + $0x40] sm:$0xff]
      %v646 = vld [vmem:[%s4 + $0x48] sm:$0xff]
      %v647 = vld [vmem:[%s4 + $0x50] sm:$0xff]
      %v648 = vld [vmem:[%s4 + $0x58] sm:$0xff]
      %650 = vset.pattern.permute.xlu0 0
      %651 = vperm.xlu0 %650, %v637
      %v652 = vpop.permute.xlu0 %651
      %655 = vset.pattern.permute.xlu0 0
      %656 = vperm.xlu0 %655, %v638
      %v657 = vpop.permute.xlu0 %656
      %660 = vset.pattern.permute.xlu0 0
      %661 = vperm.xlu0 %660, %v639
      %v662 = vpop.permute.xlu0 %661
      %665 = vset.pattern.permute.xlu0 0
      %666 = vperm.xlu0 %665, %v640
      %v667 = vpop.permute.xlu0 %666
      %670 = vset.pattern.permute.xlu0 0
      %671 = vperm.xlu0 %670, %v641
      %v672 = vpop.permute.xlu0 %671
      %675 = vset.pattern.permute.xlu0 0
      %676 = vperm.xlu0 %675, %v642
      %v677 = vpop.permute.xlu0 %676
      %680 = vset.pattern.permute.xlu0 0
      %681 = vperm.xlu0 %680, %v643
      %v682 = vpop.permute.xlu0 %681
      %685 = vset.pattern.permute.xlu0 0
      %686 = vperm.xlu0 %685, %v644
      %v687 = vpop.permute.xlu0 %686
      %690 = vset.pattern.permute.xlu0 0
      %691 = vperm.xlu0 %690, %v645
      %v692 = vpop.permute.xlu0 %691
      %695 = vset.pattern.permute.xlu0 0
      %696 = vperm.xlu0 %695, %v646
      %v697 = vpop.permute.xlu0 %696
      %700 = vset.pattern.permute.xlu0 0
      %701 = vperm.xlu0 %700, %v647
      %v702 = vpop.permute.xlu0 %701
      %705 = vset.pattern.permute.xlu0 0
      %706 = vperm.xlu0 %705, %v648
      %v707 = vpop.permute.xlu0 %706
      %v709 = vadd.f32 %v625, %v652
      %v710 = vadd.f32 %v626, %v657
      %v711 = vadd.f32 %v627, %v662
      %v712 = vadd.f32 %v628, %v667
      %v713 = vadd.f32 %v629, %v672
      %v714 = vadd.f32 %v630, %v677
      %v715 = vadd.f32 %v631, %v682
      %v716 = vadd.f32 %v632, %v687
      %v717 = vadd.f32 %v633, %v692
      %v718 = vadd.f32 %v634, %v697
      %v719 = vadd.f32 %v635, %v702
      %v720 = vadd.f32 %v636, %v707
      %721 = vst.msk [vmem:[%s255] sm:$0xff] %vm442, %v709
      %722 = vst.msk [vmem:[%s255 + $0x8] sm:$0xff] %vm442, %v710
      %723 = vst.msk [vmem:[%s255 + $0x10] sm:$0xff] %vm442, %v711
      %724 = vst.msk [vmem:[%s255 + $0x18] sm:$0xff] %vm442, %v712
      %725 = vst.msk [vmem:[%s255 + $0x20] sm:$0xff] %vm442, %v713
      %726 = vst.msk [vmem:[%s255 + $0x28] sm:$0xff] %vm442, %v714
      %727 = vst.msk [vmem:[%s255 + $0x30] sm:$0xff] %vm442, %v715
      %728 = vst.msk [vmem:[%s255 + $0x38] sm:$0xff] %vm442, %v716
      %729 = vst.msk [vmem:[%s255 + $0x40] sm:$0xff] %vm442, %v717
      %730 = vst.msk [vmem:[%s255 + $0x48] sm:$0xff] %vm442, %v718
      %731 = vst.msk [vmem:[%s255 + $0x50] sm:$0xff] %vm442, %v719
      %732 = vst.msk [vmem:[%s255 + $0x58] sm:$0xff] %vm442, %v720
      %p733 = scmp.lt.s32.totalorder %s20, 1
      %s734 = scalar_select %p733, %s20, 1
      %p735 = scmp.lt.s32.totalorder %s21, 0
      %s736 = scalar_select %p735, %s21, 0
      %s737 = smul.addr %s734, 12
      %s738 = sadd.s32 %s736, %s737
      %s739 = smul.addr %s738, 8
      %s740 = scalar_lea.vmem %s5, %s739
      // Predicated region
      $region41: #{patch_embed_3d.1} parent=39 // pred_check
        %p741 = pneg %p160
      $region42: #{patch_embed_3d.1} parent=39 // pred_check_branch
        %743 = sbr.rel (%p741) target = $region44
      $region43: #{patch_embed_3d.1} parent=39 // pred_region
        _
      $region44: #{patch_embed_3d.1} parent=39 // pred_fallthru
        _
    $region40: #{patch_embed_3d.1} parent=5 // pred_fallthru
      _
    %p744 = scmp.le.s32.totalorder 2, %s11
    // Predicated region
    $region45: #{patch_embed_3d.1} parent=5 // pred_check
      %p745 = pneg %p744
    $region46: #{patch_embed_3d.1} parent=5 // pred_check_branch
      %747 = sbr.rel (%p745) target = $region48
    $region47: #{patch_embed_3d.1} parent=5 // pred_region
      %s748 = ssub.s32 %s11, 2
      // Predicated region
      $region49: #{patch_embed_3d.1} parent=47 // pred_check
        %p749 = pneg %p166
      $region50: #{patch_embed_3d.1} parent=47 // pred_check_branch
        %751 = sbr.rel (%p749) target = $region52
      $region51: #{patch_embed_3d.1} parent=47 // pred_region
        %p752 = scmp.lt.s32.totalorder %s22, 1
        %s753 = scalar_select %p752, %s22, 1
        %p754 = scmp.lt.s32.totalorder %s23, 0
        %s755 = scalar_select %p754, %s23, 0
        %s756 = smul.addr %s753, 12
        %s757 = sadd.s32 %s755, %s756
        %s758 = smul.addr %s757, 8
        %s759 = scalar_lea.vmem %s5, %s758
      $region52: #{patch_embed_3d.1} parent=47 // pred_fallthru
        _
    $region48: #{patch_embed_3d.1} parent=5 // pred_fallthru
      _
  $region6: #{patch_embed_3d.1} parent=0 // loop_footer
    %s15 = sadd.s32 1, %s11
  $region7: #{patch_embed_3d.1} parent=0 // loop_footer_branch
    %10 = sbr.rel target = $region3
  $region8: #{patch_embed_3d.1} parent=0 // loop_exit
    _

</llo_original>
